<compile_context>
chip_gen: v6e
topology: v6e:2x2x1
jax: 0.10.0
libtpu: 0.0.40
codegen_flags: <defaults>
</compile_context>

<pallas_src>
import jax
import jax.numpy as jnp
from jax.experimental import pallas as pl
from jax.experimental.pallas import tpu as pltpu


def _round_up(x, m):
    return ((x + m - 1) // m) * m


def _inner_act(x):
    # ReLU (see TODO above).
    return jnp.maximum(x, 0.0)


def _mne_kernel(x1_ref, x2t_ref, o_ref):
    # x1_ref: (M_pad, D), x2t_ref: (D, N_pad), both VMEM tiles.
    # MXU matmul with f32 accumulation, then elementwise activation on the VPU.
    out = jnp.dot(x1_ref[...], x2t_ref[...], preferred_element_type=jnp.float32)
    o_ref[...] = _inner_act(out).astype(o_ref.dtype)


@jax.jit
def _mne_one_pair(x1, x2):
    """Single pair: grid-less pallas_call, whole padded tiles in VMEM."""
    m, d = x1.shape
    n, d2 = x2.shape
    assert d == d2, "inner dims must match"
    mp = _round_up(m, 8)        # sublane alignment
    np_ = _round_up(n, 128)     # lane-dense output (unmasked vst)
    x1p = jnp.pad(x1, ((0, mp - m), (0, 0)))
    x2tp = jnp.pad(x2.T, ((0, 0), (0, np_ - n)))   # present RHS as (D, N_pad)
    out = pl.pallas_call(
        _mne_kernel,
        out_shape=jax.ShapeDtypeStruct((mp, np_), jnp.float32),
        in_specs=[
            pl.BlockSpec(memory_space=pltpu.MemorySpace.VMEM),
            pl.BlockSpec(memory_space=pltpu.MemorySpace.VMEM),
        ],
        out_specs=pl.BlockSpec(memory_space=pltpu.MemorySpace.VMEM),
    )(x1p, x2tp)
    return out[:m, :n]


@jax.jit
def _mne_pairs(pairs):
    """Batched branch: all pairs fused into a single pallas_call, grid=(B,)."""
    b = len(pairs)
    d = pairs[0][0].shape[1]
    mp = _round_up(max(x1.shape[0] for x1, _ in pairs), 8)
    np_ = _round_up(max(x2.shape[0] for _, x2 in pairs), 128)
    x1s = jnp.stack(
        [jnp.pad(x1, ((0, mp - x1.shape[0]), (0, 0))) for x1, _ in pairs]
    )                                   # (B, M_pad, D)
    x2ts = jnp.stack(
        [jnp.pad(x2.T, ((0, 0), (0, np_ - x2.shape[0]))) for _, x2 in pairs]
    )                                   # (B, D, N_pad)

    out = pl.pallas_call(
        _mne_kernel,
        out_shape=jax.ShapeDtypeStruct((b, mp, np_), jnp.float32),
        grid=(b,),
        in_specs=[
            pl.BlockSpec((None, mp, d), lambda i: (i, 0, 0)),
            pl.BlockSpec((None, d, np_), lambda i: (i, 0, 0)),
        ],
        out_specs=pl.BlockSpec((None, mp, np_), lambda i: (i, 0, 0)),
        compiler_params=pltpu.CompilerParams(
            dimension_semantics=("parallel",),   # shard pairs across TCs on v7x
        ),
    )(x1s, x2ts)

    return tuple(
        out[i, : x1.shape[0], : x2.shape[0]]
        for i, (x1, x2) in enumerate(pairs)
    )


def mne_forward(inputs):
    """Mirrors MNE.forward: accepts a pair [x1, x2] or a list of pairs."""
    assert isinstance(inputs, list) and inputs
    if isinstance(inputs[0], (list, tuple)):
        pairs = tuple((p[0], p[1]) for p in inputs)
        for p in inputs:
            assert len(p) == 2
        return list(_mne_pairs(pairs))
    else:
        assert len(inputs) == 2
        return _mne_one_pair(inputs[0], inputs[1])


if __name__ == "__main__":
    key = jax.random.PRNGKey(0)
    k1, k2, k3, k4 = jax.random.split(key, 4)

    # input_dim = 32 (D); two graphs' node-embedding matrices with 16 / 12 nodes.
    D = 32
    x1 = jax.random.normal(k1, (16, D), dtype=jnp.float32)
    x2 = jax.random.normal(k2, (12, D), dtype=jnp.float32)

    # Single-pair path.
    out = mne_forward([x1, x2])
    out = jax.block_until_ready(out)

    # List-of-pairs path (one fused pallas_call for the whole batch).
    y1 = jax.random.normal(k3, (8, D), dtype=jnp.float32)
    y2 = jax.random.normal(k4, (8, D), dtype=jnp.float32)
    outs = mne_forward([[x1, x2], [y1, y2]])
    outs = jax.block_until_ready(outs)

    # Correctness vs. plain JAX reference (torch.mm(x1, x2.t()) + ReLU).
    ref1 = jnp.maximum(x1 @ x2.T, 0.0)
    ref2 = jnp.maximum(y1 @ y2.T, 0.0)
    assert out.shape == (16, 12)
    assert jnp.allclose(out, ref1, atol=1e-5, rtol=1e-5)
    assert outs[0].shape == (16, 12) and outs[1].shape == (8, 8)
    assert jnp.allclose(outs[0], ref1, atol=1e-5, rtol=1e-5)
    assert jnp.allclose(outs[1], ref2, atol=1e-5, rtol=1e-5)

    print("KERNEL_OK")
</pallas_src>

<mosaic_0001>
module attributes {stable_mosaic.version = 11 : i64} {
  func.func @_mne_kernel(%arg0: memref<16x32xf32, #tpu.memory_space<vmem>>, %arg1: memref<32x128xf32, #tpu.memory_space<vmem>>, %arg2: memref<16x128xf32, #tpu.memory_space<vmem>>) attributes {dimension_semantics = [], scalar_prefetch = 0 : i64, scratch_operands = 0 : i64, tpu.core_type = #tpu.core_type<tc>} {
    %c0 = arith.constant 0 : index
    %c0_0 = arith.constant 0 : index
    %0 = vector.load %arg0[%c0, %c0_0] : memref<16x32xf32, #tpu.memory_space<vmem>>, vector<16x32xf32>
    %c0_1 = arith.constant 0 : index
    %c0_2 = arith.constant 0 : index
    %1 = vector.load %arg1[%c0_1, %c0_2] : memref<32x128xf32, #tpu.memory_space<vmem>>, vector<32x128xf32>
    %cst = arith.constant dense<0.000000e+00> : vector<16x128xf32>
    %2 = tpu.matmul %0, %1, %cst {dimension_numbers = #tpu.dot_dimension_numbers<[1], [0], [0], [1], [0, 0, 1, 1], [], []>} : vector<16x32xf32>, vector<32x128xf32>, vector<16x128xf32> -> vector<16x128xf32>
    %cst_3 = arith.constant 0.000000e+00 : f32
    %3 = vector.broadcast %cst_3 : f32 to vector<16x128xf32>
    %4 = arith.maximumf %2, %3 : vector<16x128xf32>
    %c0_4 = arith.constant 0 : index
    %c0_5 = arith.constant 0 : index
    %5 = vector.load %arg2[%c0_4, %c0_5] : memref<16x128xf32, #tpu.memory_space<vmem>>, vector<16x128xf32>
    tpu.vector_store %arg2[%c0_4, %c0_5], %4 {strides = array<i32>} : memref<16x128xf32, #tpu.memory_space<vmem>>, vector<16x128xf32>,
    return
  }
}

</mosaic_0001>

<llo_original>
// kernel: _mne_one_pair.1
$region0: #{_mne_one_pair.1}
  #allocation0 [shape = 'u32[]', space=smem, size = 0x4, offset = 0x4, fixed_abs, tag = 'smem constant byte address 0x4 - core index']
  #allocation1 [shape = 'u32[144,128]{1,0:T(1,128)}', space=vmem, size = 0x12000, scoped, tag = 'internal scratch']
  %s0 = inlined_call_operand.vmem [shape: f32[16,32], index: 0, kind: input, shape index: {}]
  %s1 = inlined_call_operand.vmem [shape: f32[32,128], index: 1, kind: input, shape index: {}]
  %s2 = inlined_call_operand.hbm [shape: f32[16,128], index: 2, kind: output, shape index: {}]
  %s3 = sld [smem:[#allocation0]]
  $region18: #{_mne_one_pair.1} parent=0
    _
  %s5 = ssub.s32 1, %s3
  %s6 = scalar_select 0, %s5, %s3
  $region1: #{_mne_one_pair.1} parent=0
    #allocation2 [shape = 'u8[8192]{0}', space=vmem, size = 0x2000, scoped, tag = 'output window, operand 0, single buffered']
    #allocation3 [shape = 's32[1]{0}', space=sflag, size = 0x4, scoped, tag = 'scoped memory for _mne_one_pair.1']
    %7 = vsyncpa [#allocation3], 0
    // Predicated region
    $region2: #{_mne_one_pair.1} parent=1 // pred_check
      _
    $region3: #{_mne_one_pair.1} parent=1 // pred_check_branch
      %9 = sbr.rel (0) target = $region5
    $region4: #{_mne_one_pair.1} parent=1 // pred_region
      _
    $region5: #{_mne_one_pair.1} parent=1 // pred_fallthru
      _
    // Predicated region
    $region6: #{_mne_one_pair.1} parent=1 // pred_check
      _
    $region7: #{_mne_one_pair.1} parent=1 // pred_check_branch
      %11 = sbr.rel (0) target = $region9
    $region8: #{_mne_one_pair.1} parent=1 // pred_region
      _
    $region9: #{_mne_one_pair.1} parent=1 // pred_fallthru
      _
    %v12 = vld [vmem:[%s0] sm:$0xff]
    %v13 = vld [vmem:[%s0 + $0x8] sm:$0xff]
    %v14 = vld [vmem:[%s1] sm:$0xff]
    %v15 = vld [vmem:[%s1 + $0x8] sm:$0xff]
    %v16 = vld [vmem:[%s1 + $0x10] sm:$0xff]
    %v17 = vld [vmem:[%s1 + $0x18] sm:$0xff]
    %vm18 = vcmask 261120
    %v20 = vsel %vm18, %v12, 0
    %v23 = vsel %vm18, %v13, 0
    %25 = vmatprep.subr.mxu0 0.0
    %26 = vmatpush1.msra.mxu0 0.0
    %27 = vmatprep.subr.mxu0 0.0
    %28 = vmatpush1.msra.mxu0 0.0
    %29 = vmatprep.subr.mxu0 0.0
    %30 = vmatpush1.msra.mxu0 0.0
    %31 = vmatprep.subr.mxu0 0.0
    %32 = vmatpush1.msra.mxu0 0.0
    %33 = vmatprep.subr.mxu0 0.0
    %34 = vmatpush1.msra.mxu0 0.0
    %35 = vmatprep.subr.mxu0 0.0
    %36 = vmatpush1.msra.mxu0 0.0
    %37 = vmatprep.subr.mxu0 0.0
    %38 = vmatpush1.msra.mxu0 0.0
    %39 = vmatprep.subr.mxu0 0.0
    %40 = vmatpush1.msra.mxu0 0.0
    %41 = vmatprep.subr.mxu0 0.0
    %42 = vmatpush1.msra.mxu0 0.0
    %43 = vmatprep.subr.mxu0 0.0
    %44 = vmatpush1.msra.mxu0 0.0
    %45 = vmatprep.subr.mxu0 0.0
    %46 = vmatpush1.msra.mxu0 0.0
    %47 = vmatprep.subr.mxu0 0.0
    %48 = vmatpush1.msra.mxu0 0.0
    %49 = vmatprep.subr.mxu0 0.0
    %50 = vmatpush1.msra.mxu0 %v17
    %51 = vmatprep.subr.mxu0 0.0
    %52 = vmatpush1.msra.mxu0 %v16
    %53 = vmatprep.subr.mxu0 0.0
    %54 = vmatpush1.msra.mxu0 %v15
    %55 = vmatprep.subr.mxu0 0.0
    %56 = vmatpush1.msra.mxu0 %v14
    %57 = vmatprep.subr.mxu0 0.0
    %58 = vmatpush2.msra.mxu0 0.0
    %59 = vmatprep.subr.mxu0 0.0
    %60 = vmatpush2.msra.mxu0 0.0
    %61 = vmatprep.subr.mxu0 0.0
    %62 = vmatpush2.msra.mxu0 0.0
    %63 = vmatprep.subr.mxu0 0.0
    %64 = vmatpush2.msra.mxu0 0.0
    %65 = vmatprep.subr.mxu0 0.0
    %66 = vmatpush2.msra.mxu0 0.0
    %67 = vmatprep.subr.mxu0 0.0
    %68 = vmatpush2.msra.mxu0 0.0
    %69 = vmatprep.subr.mxu0 0.0
    %70 = vmatpush2.msra.mxu0 0.0
    %71 = vmatprep.subr.mxu0 0.0
    %72 = vmatpush2.msra.mxu0 0.0
    %73 = vmatprep.subr.mxu0 0.0
    %74 = vmatpush2.msra.mxu0 0.0
    %75 = vmatprep.subr.mxu0 0.0
    %76 = vmatpush2.msra.mxu0 0.0
    %77 = vmatprep.subr.mxu0 0.0
    %78 = vmatpush2.msra.mxu0 0.0
    %79 = vmatprep.subr.mxu0 0.0
    %80 = vmatpush2.msra.mxu0 0.0
    %81 = vmatprep.subr.mxu0 0.0
    %82 = vmatpush2.msra.mxu0 0.0
    %83 = vmatprep.subr.mxu0 0.0
    %84 = vmatpush2.msra.mxu0 0.0
    %85 = vmatprep.subr.mxu0 0.0
    %86 = vmatpush2.msra.mxu0 0.0
    %87 = vmatprep.subr.mxu0 0.0
    %88 = vmatpush2.msra.mxu0 0.0
    %89 = vmatprep.mubr.f32.mxu0 0.0
    %90 = vmatmul.mubr.f32.gmra.mxu0 %v20
    %v91 = vpop.f32.mrf.mxu0
    %v92 = vadd.f32 0.0, %v91
    %v93 = vpop.f32.mrf.mxu0
    %94 = vmatprep.mubr.f32.mxu0 0.0
    %95 = vmatmul.mubr.f32.gmra.mxu0 %v23
    %v96 = vpop.f32.mrf.mxu0
    %v97 = vadd.f32 0.0, %v96
    %v98 = vpop.f32.mrf.mxu0
    %99 = vdwg.mxu0
    %v100 = vmax.f32 %v92, 0.0
    %v101 = vmax.f32 %v97, 0.0
    %102 = vst [vmem:[#allocation2] sm:$0xff] %v100
    %103 = vst [vmem:[#allocation2 + $0x8] sm:$0xff] %v101
    // Predicated region
    $region10: #{_mne_one_pair.1} parent=1 // pred_check
      _
    $region11: #{_mne_one_pair.1} parent=1 // pred_check_branch
      %105 = sbr.rel (0) target = $region13
    $region12: #{_mne_one_pair.1} parent=1 // pred_region
      %s107 = ssub.s32 256, 256
      %108 = vsyncadd [#allocation3], %s107
      %s109 = sshll.u32 [#allocation2], 4
      %s110 = int_to_ptr.vmem [resolvable:$true] %s109
      %115 = dma.vmem_to_hbm [thread:$0]  %s110, 256, %s2, [#allocation3], 128, 128, 8
    $region13: #{_mne_one_pair.1} parent=1 // pred_fallthru
      _
    // Predicated region
    $region14: #{_mne_one_pair.1} parent=1 // pred_check
      _
    $region15: #{_mne_one_pair.1} parent=1 // pred_check_branch
      %117 = sbr.rel (0) target = $region17
    $region16: #{_mne_one_pair.1} parent=1 // pred_region
      %118 = dma.done [#allocation3], 256
    $region17: #{_mne_one_pair.1} parent=1 // pred_fallthru
      _
    %119 = vsyncpa [#allocation3], 1

</llo_original>
